<compile_context>
chip_gen: v7x
topology: tpu7x:2x2x1
jax: 0.10.0
libtpu: 0.0.40
codegen_flags: <defaults>
</compile_context>

<pallas_src>
from functools import partial

import jax
import jax.numpy as jnp
from jax import lax
from jax.experimental import pallas as pl
from jax.experimental.pallas import tpu as pltpu


def patch_len(n, blocks):
    base = n // blocks
    lens = [base] * blocks
    for i in range(n - base * blocks):
        lens[i] += 1
    assert sum(lens) == n, "check your blocks and axis should be split again"
    return lens


def _e2r_kernel(x_ref, o_ref, *, lens):
    """x_ref block: (TB, C, T).  o_ref block: (TB, nblk, C, C)."""
    c = x_ref.shape[1]

    # Diagonal mask + 1e-5 * I, built once and reused for every patch.
    ii = lax.broadcasted_iota(jnp.int32, (1, c, c), 1)
    jj = lax.broadcasted_iota(jnp.int32, (1, c, c), 2)
    diag = ii == jj
    eye_eps = jnp.where(diag, jnp.float32(1e-5), jnp.float32(0.0))

    off = 0
    for blk, lp in enumerate(lens):                     # static unroll over patches
        xp = x_ref[:, :, off:off + lp]                  # (TB, C, lp), native dtype
        off += lp

        # Gram matrix on the MXU (native-dtype operands, f32 accumulation).
        gram = jnp.einsum("bct,bdt->bcd", xp, xp,
                          preferred_element_type=jnp.float32)      # (TB, C, C)

        # Column sums (f32) -> rank-1 mean correction:
        #   cov_raw = sum_t (x_t - m)(x_t - m)^T = G - lp*m m^T = G - s s^T / lp
        s = jnp.sum(xp.astype(jnp.float32), axis=-1, keepdims=True)  # (TB, C, 1)
        ssT = jnp.einsum("bcx,bdx->bcd", s, s,
                         preferred_element_type=jnp.float32)
        cov_raw = gram - ssT * jnp.float32(1.0 / lp)

        # trace(cov/(lp-1)) normalization fuses:
        #   cov/(lp-1)/trace(cov/(lp-1)) == cov_raw / trace(cov_raw).
        # NOTE: a constant-valued patch gives trace==0 -> NaN; the PyTorch
        # reference also degenerates there (inf), so no epsilon is added.
        tra = jnp.sum(jnp.where(diag, cov_raw, 0.0),
                      axis=(-2, -1), keepdims=True)                # (TB, 1, 1)
        inv = 1.0 / tra

        o_ref[:, blk, :, :] = (cov_raw * inv + eye_eps).astype(o_ref.dtype)


def _choose_tb(B, C, T, blocks, in_itemsize, tile_budget_bytes=24 << 20):
    """Largest batch tile whose double-buffered in+out tiles fit the budget.

    Budget is ~24 MiB (vmem_limit is set to 32 MiB), which fits v7x's smaller
    VMEM as well as v5e/v6e.  TB is additionally capped at ceil(B/2) so the
    grid has >= 2 steps and the 'parallel' axis can shard across two
    TensorCores on v7x.  TB need not divide B (grid uses cdiv).
    """
    per_row = 2 * (in_itemsize * C * T + 4 * blocks * C * C)   # 2x = double buffer
    cap = max(1, tile_budget_bytes // max(per_row, 1))
    if B > 1:
        cap = min(cap, (B + 1) // 2)   # keep at least 2 grid steps for megacore
    return max(1, min(B, cap))


def e2r_forward(x, blocks):
    """E2R.forward: x (B, C, T) -> (B, blocks, C, C) float32."""
    B, C, T = x.shape
    lens = tuple(patch_len(T, int(blocks)))
    nblk = len(lens)
    TB = _choose_tb(B, C, T, nblk, x.dtype.itemsize)

    kernel = partial(_e2r_kernel, lens=lens)
    return pl.pallas_call(
        kernel,
        out_shape=jax.ShapeDtypeStruct((B, nblk, C, C), jnp.float32),
        grid=(pl.cdiv(B, TB),),
        in_specs=[pl.BlockSpec((TB, C, T), lambda i: (i, 0, 0))],
        out_specs=pl.BlockSpec((TB, nblk, C, C), lambda i: (i, 0, 0, 0)),
        compiler_params=pltpu.CompilerParams(
            dimension_semantics=("parallel",),      # megacore sharding on v7x
            vmem_limit_bytes=32 << 20),
    )(x)


def e2r_reference(x, blocks):
    """Pure-JAX reference mirroring the PyTorch semantics (for validation)."""
    B, C, T = x.shape
    lens = patch_len(T, int(blocks))
    outs = []
    off = 0
    for lp in lens:
        xp = x[..., off:off + lp].astype(jnp.float32)
        off += lp
        xc = xp - xp.mean(axis=-1, keepdims=True)
        cov = jnp.einsum("bct,bdt->bcd", xc, xc) / (lp - 1)
        tra = jnp.trace(cov, axis1=-2, axis2=-1).reshape(-1, 1, 1)
        cov = cov / tra + 1e-5 * jnp.eye(C, dtype=jnp.float32)[None]
        outs.append(cov)
    return jnp.stack(outs, axis=1)


if __name__ == "__main__":
    key = jax.random.PRNGKey(0)
    B, C, T = 2, 4, 16
    blocks = 3  # unequal patch lengths [6, 5, 5], exercising patch_len
    x = jax.random.normal(key, (B, C, T), dtype=jnp.float32)

    out = jax.block_until_ready(e2r_forward(x, blocks))
    ref = jax.block_until_ready(e2r_reference(x, blocks))

    assert out.shape == (B, blocks, C, C), out.shape
    assert jnp.allclose(out, ref, atol=3e-5, rtol=1e-4), "mismatch vs reference"
    print("KERNEL_OK")
</pallas_src>

<mosaic_0001>
module attributes {stable_mosaic.version = 11 : i64} {
  func.func @_e2r_kernel(%arg0: i32, %arg1: memref<1x4x16xf32, #tpu.memory_space<vmem>>, %arg2: memref<1x3x4x4xf32, #tpu.memory_space<vmem>>) attributes {dimension_semantics = [#tpu.dimension_semantics<parallel>], iteration_bounds = array<i64: 2>, scalar_prefetch = 0 : i64, scratch_operands = 0 : i64, tpu.core_type = #tpu.core_type<tc>, window_params = [{transform_indices = @transform_0, window_bounds = array<i64: 1, 4, 16>}, {transform_indices = @transform_1, window_bounds = array<i64: 1, 3, 4, 4>}]} {
    %0 = tpu.iota {dimensions = array<i32: 1>} : vector<1x4x4xi32>
    %1 = tpu.iota {dimensions = array<i32: 2>} : vector<1x4x4xi32>
    %2 = arith.cmpi eq, %0, %1 : vector<1x4x4xi32>
    %cst = arith.constant 9.99999974E-6 : f32
    %cst_0 = arith.constant 0.000000e+00 : f32
    %3 = vector.broadcast %cst : f32 to vector<1x4x4xf32>
    %4 = vector.broadcast %cst_0 : f32 to vector<1x4x4xf32>
    %5 = arith.select %2, %3, %4 : vector<1x4x4xi1>, vector<1x4x4xf32>
    %c0 = arith.constant 0 : index
    %c0_1 = arith.constant 0 : index
    %c0_2 = arith.constant 0 : index
    %6 = vector.load %arg1[%c0, %c0_1, %c0_2] : memref<1x4x16xf32, #tpu.memory_space<vmem>>, vector<1x4x6xf32>
    "tpu.trace_start"() <{level = 10 : i32, message = "bct,bdt->bcd"}> : () -> ()
    %cst_3 = arith.constant dense<0.000000e+00> : vector<1x4x4xf32>
    %7 = tpu.matmul %6, %6, %cst_3 {dimension_numbers = #tpu.dot_dimension_numbers<[2], [2], [1], [1], [0, 0, 0, 1, 1, 1], [0], [0]>} : vector<1x4x6xf32>, vector<1x4x6xf32>, vector<1x4x4xf32> -> vector<1x4x4xf32>
    "tpu.trace_stop"() : () -> ()
    %cst_4 = arith.constant dense<0.000000e+00> : vector<1x4xf32>
    %8 = vector.multi_reduction <add>, %6, %cst_4 [2] : vector<1x4x6xf32> to vector<1x4xf32>
    %9 = vector.shape_cast %8 : vector<1x4xf32> to vector<1x4x1xf32>
    "tpu.trace_start"() <{level = 10 : i32, message = "bcx,bdx->bcd"}> : () -> ()
    %cst_5 = arith.constant dense<0.000000e+00> : vector<1x4x4xf32>
    %10 = tpu.matmul %9, %9, %cst_5 {dimension_numbers = #tpu.dot_dimension_numbers<[2], [2], [1], [1], [0, 0, 0, 1, 1, 1], [0], [0]>} : vector<1x4x1xf32>, vector<1x4x1xf32>, vector<1x4x4xf32> -> vector<1x4x4xf32>
    "tpu.trace_stop"() : () -> ()
    %cst_6 = arith.constant 0.166666672 : f32
    %11 = vector.broadcast %cst_6 : f32 to vector<1x4x4xf32>
    %12 = arith.mulf %10, %11 : vector<1x4x4xf32>
    %13 = arith.subf %7, %12 : vector<1x4x4xf32>
    %cst_7 = arith.constant 0.000000e+00 : f32
    %14 = vector.broadcast %cst_7 : f32 to vector<1x4x4xf32>
    %15 = arith.select %2, %13, %14 : vector<1x4x4xi1>, vector<1x4x4xf32>
    %cst_8 = arith.constant dense<0.000000e+00> : vector<1xf32>
    %16 = vector.multi_reduction <add>, %15, %cst_8 [1, 2] : vector<1x4x4xf32> to vector<1xf32>
    %17 = vector.shape_cast %16 : vector<1xf32> to vector<1x1x1xf32>
    %cst_9 = arith.constant 1.000000e+00 : f32
    %18 = vector.broadcast %cst_9 : f32 to vector<1x1x1xf32>
    %19 = arith.divf %18, %17 : vector<1x1x1xf32>
    %20 = vector.broadcast %19 : vector<1x1x1xf32> to vector<1x4x4xf32>
    %21 = arith.mulf %13, %20 : vector<1x4x4xf32>
    %22 = arith.addf %21, %5 : vector<1x4x4xf32>
    %c0_10 = arith.constant 0 : index
    %c0_11 = arith.constant 0 : index
    %c0_12 = arith.constant 0 : index
    %c0_13 = arith.constant 0 : index
    %23 = vector.load %arg2[%c0_10, %c0_11, %c0_12, %c0_13] : memref<1x3x4x4xf32, #tpu.memory_space<vmem>>, vector<1x1x4x4xf32>
    %24 = vector.shape_cast %23 : vector<1x1x4x4xf32> to vector<1x4x4xf32>
    %25 = vector.shape_cast %22 : vector<1x4x4xf32> to vector<1x1x4x4xf32>
    tpu.vector_store %arg2[%c0_10, %c0_11, %c0_12, %c0_13], %25 {strides = array<i32>} : memref<1x3x4x4xf32, #tpu.memory_space<vmem>>, vector<1x1x4x4xf32>,
    %c0_14 = arith.constant 0 : index
    %c0_15 = arith.constant 0 : index
    %c6 = arith.constant 6 : index
    %26 = vector.load %arg1[%c0_14, %c0_15, %c6] : memref<1x4x16xf32, #tpu.memory_space<vmem>>, vector<1x4x5xf32>
    "tpu.trace_start"() <{level = 10 : i32, message = "bct,bdt->bcd"}> : () -> ()
    %cst_16 = arith.constant dense<0.000000e+00> : vector<1x4x4xf32>
    %27 = tpu.matmul %26, %26, %cst_16 {dimension_numbers = #tpu.dot_dimension_numbers<[2], [2], [1], [1], [0, 0, 0, 1, 1, 1], [0], [0]>} : vector<1x4x5xf32>, vector<1x4x5xf32>, vector<1x4x4xf32> -> vector<1x4x4xf32>
    "tpu.trace_stop"() : () -> ()
    %cst_17 = arith.constant dense<0.000000e+00> : vector<1x4xf32>
    %28 = vector.multi_reduction <add>, %26, %cst_17 [2] : vector<1x4x5xf32> to vector<1x4xf32>
    %29 = vector.shape_cast %28 : vector<1x4xf32> to vector<1x4x1xf32>
    "tpu.trace_start"() <{level = 10 : i32, message = "bcx,bdx->bcd"}> : () -> ()
    %cst_18 = arith.constant dense<0.000000e+00> : vector<1x4x4xf32>
    %30 = tpu.matmul %29, %29, %cst_18 {dimension_numbers = #tpu.dot_dimension_numbers<[2], [2], [1], [1], [0, 0, 0, 1, 1, 1], [0], [0]>} : vector<1x4x1xf32>, vector<1x4x1xf32>, vector<1x4x4xf32> -> vector<1x4x4xf32>
    "tpu.trace_stop"() : () -> ()
    %cst_19 = arith.constant 2.000000e-01 : f32
    %31 = vector.broadcast %cst_19 : f32 to vector<1x4x4xf32>
    %32 = arith.mulf %30, %31 : vector<1x4x4xf32>
    %33 = arith.subf %27, %32 : vector<1x4x4xf32>
    %cst_20 = arith.constant 0.000000e+00 : f32
    %34 = vector.broadcast %cst_20 : f32 to vector<1x4x4xf32>
    %35 = arith.select %2, %33, %34 : vector<1x4x4xi1>, vector<1x4x4xf32>
    %cst_21 = arith.constant dense<0.000000e+00> : vector<1xf32>
    %36 = vector.multi_reduction <add>, %35, %cst_21 [1, 2] : vector<1x4x4xf32> to vector<1xf32>
    %37 = vector.shape_cast %36 : vector<1xf32> to vector<1x1x1xf32>
    %cst_22 = arith.constant 1.000000e+00 : f32
    %38 = vector.broadcast %cst_22 : f32 to vector<1x1x1xf32>
    %39 = arith.divf %38, %37 : vector<1x1x1xf32>
    %40 = vector.broadcast %39 : vector<1x1x1xf32> to vector<1x4x4xf32>
    %41 = arith.mulf %33, %40 : vector<1x4x4xf32>
    %42 = arith.addf %41, %5 : vector<1x4x4xf32>
    %c0_23 = arith.constant 0 : index
    %c1 = arith.constant 1 : index
    %c0_24 = arith.constant 0 : index
    %c0_25 = arith.constant 0 : index
    %43 = vector.load %arg2[%c0_23, %c1, %c0_24, %c0_25] : memref<1x3x4x4xf32, #tpu.memory_space<vmem>>, vector<1x1x4x4xf32>
    %44 = vector.shape_cast %43 : vector<1x1x4x4xf32> to vector<1x4x4xf32>
    %45 = vector.shape_cast %42 : vector<1x4x4xf32> to vector<1x1x4x4xf32>
    tpu.vector_store %arg2[%c0_23, %c1, %c0_24, %c0_25], %45 {strides = array<i32>} : memref<1x3x4x4xf32, #tpu.memory_space<vmem>>, vector<1x1x4x4xf32>,
    %c0_26 = arith.constant 0 : index
    %c0_27 = arith.constant 0 : index
    %c11 = arith.constant 11 : index
    %46 = vector.load %arg1[%c0_26, %c0_27, %c11] : memref<1x4x16xf32, #tpu.memory_space<vmem>>, vector<1x4x5xf32>
    "tpu.trace_start"() <{level = 10 : i32, message = "bct,bdt->bcd"}> : () -> ()
    %cst_28 = arith.constant dense<0.000000e+00> : vector<1x4x4xf32>
    %47 = tpu.matmul %46, %46, %cst_28 {dimension_numbers = #tpu.dot_dimension_numbers<[2], [2], [1], [1], [0, 0, 0, 1, 1, 1], [0], [0]>} : vector<1x4x5xf32>, vector<1x4x5xf32>, vector<1x4x4xf32> -> vector<1x4x4xf32>
    "tpu.trace_stop"() : () -> ()
    %cst_29 = arith.constant dense<0.000000e+00> : vector<1x4xf32>
    %48 = vector.multi_reduction <add>, %46, %cst_29 [2] : vector<1x4x5xf32> to vector<1x4xf32>
    %49 = vector.shape_cast %48 : vector<1x4xf32> to vector<1x4x1xf32>
    "tpu.trace_start"() <{level = 10 : i32, message = "bcx,bdx->bcd"}> : () -> ()
    %cst_30 = arith.constant dense<0.000000e+00> : vector<1x4x4xf32>
    %50 = tpu.matmul %49, %49, %cst_30 {dimension_numbers = #tpu.dot_dimension_numbers<[2], [2], [1], [1], [0, 0, 0, 1, 1, 1], [0], [0]>} : vector<1x4x1xf32>, vector<1x4x1xf32>, vector<1x4x4xf32> -> vector<1x4x4xf32>
    "tpu.trace_stop"() : () -> ()
    %cst_31 = arith.constant 2.000000e-01 : f32
    %51 = vector.broadcast %cst_31 : f32 to vector<1x4x4xf32>
    %52 = arith.mulf %50, %51 : vector<1x4x4xf32>
    %53 = arith.subf %47, %52 : vector<1x4x4xf32>
    %cst_32 = arith.constant 0.000000e+00 : f32
    %54 = vector.broadcast %cst_32 : f32 to vector<1x4x4xf32>
    %55 = arith.select %2, %53, %54 : vector<1x4x4xi1>, vector<1x4x4xf32>
    %cst_33 = arith.constant dense<0.000000e+00> : vector<1xf32>
    %56 = vector.multi_reduction <add>, %55, %cst_33 [1, 2] : vector<1x4x4xf32> to vector<1xf32>
    %57 = vector.shape_cast %56 : vector<1xf32> to vector<1x1x1xf32>
    %cst_34 = arith.constant 1.000000e+00 : f32
    %58 = vector.broadcast %cst_34 : f32 to vector<1x1x1xf32>
    %59 = arith.divf %58, %57 : vector<1x1x1xf32>
    %60 = vector.broadcast %59 : vector<1x1x1xf32> to vector<1x4x4xf32>
    %61 = arith.mulf %53, %60 : vector<1x4x4xf32>
    %62 = arith.addf %61, %5 : vector<1x4x4xf32>
    %c0_35 = arith.constant 0 : index
    %c2 = arith.constant 2 : index
    %c0_36 = arith.constant 0 : index
    %c0_37 = arith.constant 0 : index
    %63 = vector.load %arg2[%c0_35, %c2, %c0_36, %c0_37] : memref<1x3x4x4xf32, #tpu.memory_space<vmem>>, vector<1x1x4x4xf32>
    %64 = vector.shape_cast %63 : vector<1x1x4x4xf32> to vector<1x4x4xf32>
    %65 = vector.shape_cast %62 : vector<1x4x4xf32> to vector<1x1x4x4xf32>
    tpu.vector_store %arg2[%c0_35, %c2, %c0_36, %c0_37], %65 {strides = array<i32>} : memref<1x3x4x4xf32, #tpu.memory_space<vmem>>, vector<1x1x4x4xf32>,
    return
  }
  func.func @transform_0(%arg0: i32) -> (i32, i32, i32) {
    %c0_i32 = arith.constant 0 : i32
    %c0_i32_0 = arith.constant 0 : i32
    %c0_i32_1 = arith.constant 0 : i32
    return %arg0, %c0_i32, %c0_i32_0 : i32, i32, i32
  }
  func.func @transform_1(%arg0: i32) -> (i32, i32, i32, i32) {
    %c0_i32 = arith.constant 0 : i32
    %c0_i32_0 = arith.constant 0 : i32
    %c0_i32_1 = arith.constant 0 : i32
    %c0_i32_2 = arith.constant 0 : i32
    return %arg0, %c0_i32, %c0_i32_0, %c0_i32_1 : i32, i32, i32, i32
  }
}

</mosaic_0001>

<llo_original>
// kernel: tpu_custom_call.1
$region0: #{tpu_custom_call.1}
  #allocation0 [shape = 'u32[]', space=smem, size = 0x4, offset = 0x4, fixed_abs, tag = 'smem constant byte address 0x4 - core index']
  #allocation1 [shape = 'u32[144,128]{1,0:T(1,128)}', space=vmem, size = 0x12000, scoped, tag = 'internal scratch']
  %s0 = inlined_call_operand.hbm [shape: f32[2,4,16], index: 0, kind: input, shape index: {}]
  %s1 = inlined_call_operand.hbm [shape: f32[2,3,4,4], index: 1, kind: output, shape index: {}]
  %s2 = sld [smem:[#allocation0]]
  $region41: #{tpu_custom_call.1} parent=0
    _
  %s4 = ssub.s32 1, %s2
  %s5 = scalar_select 0, %s4, %s2
  $region1: #{tpu_custom_call.1} parent=0
    #allocation2 [shape = 'u8[4096]{0}', space=vmem, size = 0x1000, scoped, tag = 'input window, operand 0']
    #allocation3 [shape = 's32[2]{0}', space=sflag, size = 0x8, scoped, tag = 'scoped memory for tpu_custom_call.1']
    #allocation4 [shape = 's32[2]{0}', space=sflag, size = 0x8, scoped, tag = 'scoped memory for tpu_custom_call.1']
    #allocation5 [shape = 'u8[12288]{0}', space=vmem, size = 0x3000, scoped, tag = 'output window, operand 0']
    %6 = vsyncpa [#allocation3], 0
    %s7 = scalar_lea.sflag [#allocation3], 1
    %8 = vsyncpa %s7, 0
    %9 = vsyncpa [#allocation4], 0
    %s10 = scalar_lea.sflag [#allocation4], 1
    %11 = vsyncpa %s10, 0
    loop: start=0, step=1, limit=4
    $region2: #{tpu_custom_call.1} parent=1 // loop_pre_header
      _
    $region3: #{tpu_custom_call.1} parent=1 // loop_header
      %s13 = sphi 0, %s17
      %p14 = scmp.ge.s32.totalorder %s13, 4
      %s23 = sphi 0, %s25
      %s26 = sphi 0, %s23
      %s27 = sphi 0, %s26
      %s43 = sphi 0, %s27
      %s49 = sphi 0, %s51
      %s52 = sphi 0, %s49
      %s53 = sphi 0, %s52
      %s69 = sphi 0, %s53
    $region4: #{tpu_custom_call.1} parent=1 // loop_header_branch
      %16 = sbr.rel (%p14) target = $region8
    $region5: #{tpu_custom_call.1} parent=1 // loop_body
      %s18 = ssub.s32 %s13, 1
      %s19 = ssub.s32 %s13, 2
      %s20 = sadd.s32 %s13, 1
      %s21 = ssub.s32 %s13, %s20
      %p22 = scmp.eq.s32.totalorder %s21, 0
      %s24 = sadd.s32 %s23, 1
      %s25 = scalar_select %p22, %s23, %s24
      %p28 = pneg %p22
      %p29 = scmp.eq.s32.totalorder %s13, 1
      %p30 = por %p28, %p29
      %p31 = scmp.ne.s32.totalorder %s23, %s26
      %p32 = scmp.eq.s32.totalorder %s13, 0
      %p33 = por %p31, %p32
      %p34 = scmp.ne.s32.totalorder %s23, %s26
      %p35 = scmp.eq.s32.totalorder %s18, 1
      %p36 = por %p34, %p35
      %p37 = scmp.ne.s32.totalorder %s26, %s27
      %p38 = scmp.eq.s32.totalorder %s18, 0
      %p39 = por %p37, %p38
      %p40 = scmp.ne.s32.totalorder %s26, %s27
      %p41 = scmp.eq.s32.totalorder %s19, 1
      %p42 = por %p40, %p41
      %p44 = scmp.ne.s32.totalorder %s27, %s43
      %p45 = scmp.eq.s32.totalorder %s19, 0
      %p46 = por %p44, %p45
      %s47 = ssub.s32 %s13, %s20
      %p48 = scmp.eq.s32.totalorder %s47, 0
      %s50 = sadd.s32 %s49, 1
      %s51 = scalar_select %p48, %s49, %s50
      %p54 = pneg %p48
      %p55 = scmp.eq.s32.totalorder %s13, 1
      %p56 = por %p54, %p55
      %p57 = scmp.ne.s32.totalorder %s49, %s52
      %p58 = scmp.eq.s32.totalorder %s13, 0
      %p59 = por %p57, %p58
      %p60 = scmp.ne.s32.totalorder %s49, %s52
      %p61 = scmp.eq.s32.totalorder %s18, 1
      %p62 = por %p60, %p61
      %p63 = scmp.ne.s32.totalorder %s52, %s53
      %p64 = scmp.eq.s32.totalorder %s18, 0
      %p65 = por %p63, %p64
      %p66 = scmp.ne.s32.totalorder %s52, %s53
      %p67 = scmp.eq.s32.totalorder %s19, 1
      %p68 = por %p66, %p67
      %p70 = scmp.ne.s32.totalorder %s53, %s69
      %p71 = scmp.eq.s32.totalorder %s19, 0
      %p72 = por %p70, %p71
      %p73 = scmp.le.s32.totalorder 1, %s13
      %p74 = scmp.lt.s32.totalorder %s13, 3
      %p75 = pnand %p73, %p74
      %p76 = pneg %p75
      // Predicated region
      $region9: #{tpu_custom_call.1} parent=5 // pred_check
        _
      $region10: #{tpu_custom_call.1} parent=5 // pred_check_branch
        %78 = sbr.rel (%p75) target = $region12
      $region11: #{tpu_custom_call.1} parent=5 // pred_region
        %s79 = ssub.s32 %s13, 1
      $region12: #{tpu_custom_call.1} parent=5 // pred_fallthru
        _
      %p80 = scmp.lt.s32.totalorder %s13, 2
      // Predicated region
      $region13: #{tpu_custom_call.1} parent=5 // pred_check
        %p81 = pneg %p80
      $region14: #{tpu_custom_call.1} parent=5 // pred_check_branch
        %83 = sbr.rel (%p81) target = $region16
      $region15: #{tpu_custom_call.1} parent=5 // pred_region
        // Predicated region
        $region17: #{tpu_custom_call.1} parent=15 // pred_check
          %p84 = pneg %p33
        $region18: #{tpu_custom_call.1} parent=15 // pred_check_branch
          %86 = sbr.rel (%p84) target = $region20
        $region19: #{tpu_custom_call.1} parent=15 // pred_region
          %s87 = sand.u32 %s23, 1
          %s88 = scalar_lea.sflag [#allocation3], %s87
          %s89 = sand.u32 %s23, 1
          %s90 = smul.addr %s89, 4
          %s91 = scalar_lea.vmem [#allocation2], %s90
          %s93 = ssub.s32 64, 64
          %94 = vsyncadd %s88, %s93
          %s95 = smul.addr %s13, 64
          %s96 = scalar_lea.hbm %s0, %s95
          %s98 = sshll.u32 %s91, 4
          %s99 = int_to_ptr.vmem [resolvable:$true] %s98
          %101 = dma.hbm_to_vmem [thread:$0]  %s96, 64, %s99, %s88
        $region20: #{tpu_custom_call.1} parent=15 // pred_fallthru
          _
      $region16: #{tpu_custom_call.1} parent=5 // pred_fallthru
        _
      %p102 = scmp.le.s32.totalorder 1, %s13
      %p103 = scmp.lt.s32.totalorder %s13, 3
      %p104 = pnand %p102, %p103
      %p105 = pneg %p104
      // Predicated region
      $region21: #{tpu_custom_call.1} parent=5 // pred_check
        _
      $region22: #{tpu_custom_call.1} parent=5 // pred_check_branch
        %107 = sbr.rel (%p104) target = $region24
      $region23: #{tpu_custom_call.1} parent=5 // pred_region
        %s108 = ssub.s32 %s13, 1
        %s109 = sand.u32 %s26, 1
        %s110 = scalar_lea.sflag [#allocation3], %s109
        %s111 = sand.u32 %s26, 1
        %s112 = smul.addr %s111, 4
        %s113 = scalar_lea.vmem [#allocation2], %s112
        // Predicated region
        $region25: #{tpu_custom_call.1} parent=23 // pred_check
          %p114 = pneg %p39
        $region26: #{tpu_custom_call.1} parent=23 // pred_check_branch
          %116 = sbr.rel (%p114) target = $region28
        $region27: #{tpu_custom_call.1} parent=23 // pred_region
          %117 = dma.done %s110, 64
        $region28: #{tpu_custom_call.1} parent=23 // pred_fallthru
          _
        %s118 = sand.u32 %s26, 1
        %s119 = scalar_lea.sflag [#allocation3], %s118
        %s120 = sand.u32 %s26, 1
        %s121 = smul.addr %s120, 4
        %s122 = scalar_lea.vmem [#allocation2], %s121
        %p123 = pneg %p39
        %p124 = pneg %p36
        %p125 = pneg %p65
        %p126 = pneg %p62
        %s127 = sand.u32 %s52, 1
        %s128 = scalar_lea.sflag [#allocation4], %s127
        %s129 = sand.u32 %s52, 1
        %s130 = smul.addr %s129, 12
        %s131 = scalar_lea.vmem [#allocation5], %s130
        %v132 = vlaneseq
        %v133 = vshrl.u32 %v132, 7
        %v134 = vlaneseq
        %v135 = vand.u32 %v134, 127
        %vm136 = vcmp.eq.s32.totalorder %v133, %v135
        %v137 = vsel %vm136, 1e-05, 0.0
        %v138 = vld [vmem:[%s113] sm:$0xf]
        %vm139 = vcmask 48128
        %v141 = vsel %vm139, %v138, 0
        %143 = vmatprep.subr.mxu0 0.0
        %144 = vmatpush1.xpose.msra.mxu0 %v141
        %145 = vmatprep.subr.mxu0 0.0
        %146 = vmatpush1.xpose.msra.mxu0 0.0
        %147 = vmatprep.subr.mxu0 0.0
        %148 = vmatpush1.xpose.msra.mxu0 0.0
        %149 = vmatprep.subr.mxu0 0.0
        %150 = vmatpush1.xpose.msra.mxu0 0.0
        %151 = vmatprep.subr.mxu0 0.0
        %152 = vmatpush1.xpose.msra.mxu0 0.0
        %153 = vmatprep.subr.mxu0 0.0
        %154 = vmatpush1.xpose.msra.mxu0 0.0
        %155 = vmatprep.subr.mxu0 0.0
        %156 = vmatpush1.xpose.msra.mxu0 0.0
        %157 = vmatprep.subr.mxu0 0.0
        %158 = vmatpush1.xpose.msra.mxu0 0.0
        %159 = vmatprep.subr.mxu0 0.0
        %160 = vmatpush1.xpose.msra.mxu0 0.0
        %161 = vmatprep.subr.mxu0 0.0
        %162 = vmatpush1.xpose.msra.mxu0 0.0
        %163 = vmatprep.subr.mxu0 0.0
        %164 = vmatpush1.xpose.msra.mxu0 0.0
        %165 = vmatprep.subr.mxu0 0.0
        %166 = vmatpush1.xpose.msra.mxu0 0.0
        %167 = vmatprep.subr.mxu0 0.0
        %168 = vmatpush1.xpose.msra.mxu0 0.0
        %169 = vmatprep.subr.mxu0 0.0
        %170 = vmatpush1.xpose.msra.mxu0 0.0
        %171 = vmatprep.subr.mxu0 0.0
        %172 = vmatpush1.xpose.msra.mxu0 0.0
        %173 = vmatprep.subr.mxu0 0.0
        %174 = vmatpush1.xpose.msra.mxu0 0.0
        %175 = vmatprep.subr.mxu0 0.0
        %176 = vmatpush1.xpose.msra.mxu0 0.0
        %177 = vmatprep.subr.mxu0 0.0
        %178 = vmatpush1.xpose.msra.mxu0 0.0
        %179 = vmatprep.subr.mxu0 0.0
        %180 = vmatpush1.xpose.msra.mxu0 0.0
        %181 = vmatprep.subr.mxu0 0.0
        %182 = vmatpush1.xpose.msra.mxu0 0.0
        %183 = vmatprep.subr.mxu0 0.0
        %184 = vmatpush1.xpose.msra.mxu0 0.0
        %185 = vmatprep.subr.mxu0 0.0
        %186 = vmatpush1.xpose.msra.mxu0 0.0
        %187 = vmatprep.subr.mxu0 0.0
        %188 = vmatpush1.xpose.msra.mxu0 0.0
        %189 = vmatprep.subr.mxu0 0.0
        %190 = vmatpush1.xpose.msra.mxu0 0.0
        %191 = vmatprep.subr.mxu0 0.0
        %192 = vmatpush1.xpose.msra.mxu0 0.0
        %193 = vmatprep.subr.mxu0 0.0
        %194 = vmatpush1.xpose.msra.mxu0 0.0
        %195 = vmatprep.subr.mxu0 0.0
        %196 = vmatpush1.xpose.msra.mxu0 0.0
        %197 = vmatprep.subr.mxu0 0.0
        %198 = vmatpush1.xpose.msra.mxu0 0.0
        %199 = vmatprep.subr.mxu0 0.0
        %200 = vmatpush1.xpose.msra.mxu0 0.0
        %201 = vmatprep.subr.mxu0 0.0
        %202 = vmatpush1.xpose.msra.mxu0 0.0
        %203 = vmatprep.subr.mxu0 0.0
        %204 = vmatpush1.xpose.msra.mxu0 0.0
        %205 = vmatprep.subr.mxu0 0.0
        %206 = vmatpush1.xpose.msra.mxu0 0.0
        %207 = vmatprep.mubr.f32.mxu0 0.0
        %208 = vmatmul.mubr.f32.gmra.mrb[0].mxu0 %v141
        %v209 = vpop.f32.mrb[0].mxu0
        %v210 = vadd.f32 0.0, %v209
        %v211 = vpop.f32.mrb[0].mxu0
        %212 = vdwg.mxu0
        %vm213 = vcmask 44032
        %v214 = vsel %vm213, %v138, 0.0
        %215 = vadd.xlane.f32.xlu0 %v214
        %v216 = vpop.xlane.xlu0 %215
        %vm217 = vcmask 7168
        %v219 = vsel %vm217, %v216, 0
        %221 = vmatprep.subr.mxu0 0.0
        %222 = vmatpush1.xpose.msra.mxu0 %v219
        %223 = vmatprep.subr.mxu0 0.0
        %224 = vmatpush1.xpose.msra.mxu0 0.0
        %225 = vmatprep.subr.mxu0 0.0
        %226 = vmatpush1.xpose.msra.mxu0 0.0
        %227 = vmatprep.subr.mxu0 0.0
        %228 = vmatpush1.xpose.msra.mxu0 0.0
        %229 = vmatprep.subr.mxu0 0.0
        %230 = vmatpush1.xpose.msra.mxu0 0.0
        %231 = vmatprep.subr.mxu0 0.0
        %232 = vmatpush1.xpose.msra.mxu0 0.0
        %233 = vmatprep.subr.mxu0 0.0
        %234 = vmatpush1.xpose.msra.mxu0 0.0
        %235 = vmatprep.subr.mxu0 0.0
        %236 = vmatpush1.xpose.msra.mxu0 0.0
        %237 = vmatprep.subr.mxu0 0.0
        %238 = vmatpush1.xpose.msra.mxu0 0.0
        %239 = vmatprep.subr.mxu0 0.0
        %240 = vmatpush1.xpose.msra.mxu0 0.0
        %241 = vmatprep.subr.mxu0 0.0
        %242 = vmatpush1.xpose.msra.mxu0 0.0
        %243 = vmatprep.subr.mxu0 0.0
        %244 = vmatpush1.xpose.msra.mxu0 0.0
        %245 = vmatprep.subr.mxu0 0.0
        %246 = vmatpush1.xpose.msra.mxu0 0.0
        %247 = vmatprep.subr.mxu0 0.0
        %248 = vmatpush1.xpose.msra.mxu0 0.0
        %249 = vmatprep.subr.mxu0 0.0
        %250 = vmatpush1.xpose.msra.mxu0 0.0
        %251 = vmatprep.subr.mxu0 0.0
        %252 = vmatpush1.xpose.msra.mxu0 0.0
        %253 = vmatprep.subr.mxu0 0.0
        %254 = vmatpush1.xpose.msra.mxu0 0.0
        %255 = vmatprep.subr.mxu0 0.0
        %256 = vmatpush1.xpose.msra.mxu0 0.0
        %257 = vmatprep.subr.mxu0 0.0
        %258 = vmatpush1.xpose.msra.mxu0 0.0
        %259 = vmatprep.subr.mxu0 0.0
        %260 = vmatpush1.xpose.msra.mxu0 0.0
        %261 = vmatprep.subr.mxu0 0.0
        %262 = vmatpush1.xpose.msra.mxu0 0.0
        %263 = vmatprep.subr.mxu0 0.0
        %264 = vmatpush1.xpose.msra.mxu0 0.0
        %265 = vmatprep.subr.mxu0 0.0
        %266 = vmatpush1.xpose.msra.mxu0 0.0
        %267 = vmatprep.subr.mxu0 0.0
        %268 = vmatpush1.xpose.msra.mxu0 0.0
        %269 = vmatprep.subr.mxu0 0.0
        %270 = vmatpush1.xpose.msra.mxu0 0.0
        %271 = vmatprep.subr.mxu0 0.0
        %272 = vmatpush1.xpose.msra.mxu0 0.0
        %273 = vmatprep.subr.mxu0 0.0
        %274 = vmatpush1.xpose.msra.mxu0 0.0
        %275 = vmatprep.subr.mxu0 0.0
        %276 = vmatpush1.xpose.msra.mxu0 0.0
        %277 = vmatprep.subr.mxu0 0.0
        %278 = vmatpush1.xpose.msra.mxu0 0.0
        %279 = vmatprep.subr.mxu0 0.0
        %280 = vmatpush1.xpose.msra.mxu0 0.0
        %281 = vmatprep.subr.mxu0 0.0
        %282 = vmatpush1.xpose.msra.mxu0 0.0
        %283 = vmatprep.subr.mxu0 0.0
        %284 = vmatpush1.xpose.msra.mxu0 0.0
        %285 = vmatprep.mubr.f32.mxu0 0.0
        %286 = vmatmul.mubr.f32.gmra.mrb[0].mxu0 %v219
        %v287 = vpop.f32.mrb[0].mxu0
        %v288 = vadd.f32 0.0, %v287
        %v289 = vpop.f32.mrb[0].mxu0
        %290 = vdwg.mxu0
        %v291 = vmul.f32 %v288, 0.16666667
        %v292 = vsub.f32 %v210, %v291
        %v293 = vsel %vm136, %v292, 0.0
        %vm294 = vcmask 27648
        %v295 = vsel %vm294, %v293, 0.0
        %296 = vadd.xlane.f32.xlu0 %v295
        %v297 = vpop.xlane.xlu0 %296
        %v298 = vrot.slane %v297, 4
        %v299 = vadd.f32 %v297, %v298
        %v300 = vrot.slane %v299, 2
        %v301 = vadd.f32 %v299, %v300
        %v302 = vrot.slane %v301, 1
        %v303 = vadd.f32 %v301, %v302
        %v304 = vrcp.pop %v303
        %v305 = vmul.f32 1.0, %v304
        %v306 = vmul.f32 %v292, %v305
        %v307 = vadd.f32 %v306, %v137
        %308 = vst.msk [vmem:[%s131] sm:$0xf] %vm294, %v307
        %v309 = vld [vmem:[%s113] sm:$0xf]
        %311 = vrot.lane.b32.xlu0 %v309, 122
        %v312 = vpop.permute.xlu0 %311
        %vm313 = vcmask 39936
        %v314 = vsel %vm313, %v312, 0
        %316 = vmatprep.subr.mxu0 0.0
        %317 = vmatpush1.xpose.msra.mxu0 %v314
        %318 = vmatprep.subr.mxu0 0.0
        %319 = vmatpush1.xpose.msra.mxu0 0.0
        %320 = vmatprep.subr.mxu0 0.0
        %321 = vmatpush1.xpose.msra.mxu0 0.0
        %322 = vmatprep.subr.mxu0 0.0
        %323 = vmatpush1.xpose.msra.mxu0 0.0
        %324 = vmatprep.subr.mxu0 0.0
        %325 = vmatpush1.xpose.msra.mxu0 0.0
        %326 = vmatprep.subr.mxu0 0.0
        %327 = vmatpush1.xpose.msra.mxu0 0.0
        %328 = vmatprep.subr.mxu0 0.0
        %329 = vmatpush1.xpose.msra.mxu0 0.0
        %330 = vmatprep.subr.mxu0 0.0
        %331 = vmatpush1.xpose.msra.mxu0 0.0
        %332 = vmatprep.subr.mxu0 0.0
        %333 = vmatpush1.xpose.msra.mxu0 0.0
        %334 = vmatprep.subr.mxu0 0.0
        %335 = vmatpush1.xpose.msra.mxu0 0.0
        %336 = vmatprep.subr.mxu0 0.0
        %337 = vmatpush1.xpose.msra.mxu0 0.0
        %338 = vmatprep.subr.mxu0 0.0
        %339 = vmatpush1.xpose.msra.mxu0 0.0
        %340 = vmatprep.subr.mxu0 0.0
        %341 = vmatpush1.xpose.msra.mxu0 0.0
        %342 = vmatprep.subr.mxu0 0.0
        %343 = vmatpush1.xpose.msra.mxu0 0.0
        %344 = vmatprep.subr.mxu0 0.0
        %345 = vmatpush1.xpose.msra.mxu0 0.0
        %346 = vmatprep.subr.mxu0 0.0
        %347 = vmatpush1.xpose.msra.mxu0 0.0
        %348 = vmatprep.subr.mxu0 0.0
        %349 = vmatpush1.xpose.msra.mxu0 0.0
        %350 = vmatprep.subr.mxu0 0.0
        %351 = vmatpush1.xpose.msra.mxu0 0.0
        %352 = vmatprep.subr.mxu0 0.0
        %353 = vmatpush1.xpose.msra.mxu0 0.0
        %354 = vmatprep.subr.mxu0 0.0
        %355 = vmatpush1.xpose.msra.mxu0 0.0
        %356 = vmatprep.subr.mxu0 0.0
        %357 = vmatpush1.xpose.msra.mxu0 0.0
        %358 = vmatprep.subr.mxu0 0.0
        %359 = vmatpush1.xpose.msra.mxu0 0.0
        %360 = vmatprep.subr.mxu0 0.0
        %361 = vmatpush1.xpose.msra.mxu0 0.0
        %362 = vmatprep.subr.mxu0 0.0
        %363 = vmatpush1.xpose.msra.mxu0 0.0
        %364 = vmatprep.subr.mxu0 0.0
        %365 = vmatpush1.xpose.msra.mxu0 0.0
        %366 = vmatprep.subr.mxu0 0.0
        %367 = vmatpush1.xpose.msra.mxu0 0.0
        %368 = vmatprep.subr.mxu0 0.0
        %369 = vmatpush1.xpose.msra.mxu0 0.0
        %370 = vmatprep.subr.mxu0 0.0
        %371 = vmatpush1.xpose.msra.mxu0 0.0
        %372 = vmatprep.subr.mxu0 0.0
        %373 = vmatpush1.xpose.msra.mxu0 0.0
        %374 = vmatprep.subr.mxu0 0.0
        %375 = vmatpush1.xpose.msra.mxu0 0.0
        %376 = vmatprep.subr.mxu0 0.0
        %377 = vmatpush1.xpose.msra.mxu0 0.0
        %378 = vmatprep.subr.mxu0 0.0
        %379 = vmatpush1.xpose.msra.mxu0 0.0
        %380 = vmatprep.mubr.f32.mxu0 0.0
        %381 = vmatmul.mubr.f32.gmra.mrb[0].mxu0 %v314
        %v382 = vpop.f32.mrb[0].mxu0
        %v383 = vadd.f32 0.0, %v382
        %v384 = vpop.f32.mrb[0].mxu0
        %385 = vdwg.mxu0
        %vm387 = vcmask 35840
        %v388 = vsel %vm387, %v312, 0.0
        %389 = vadd.xlane.f32.xlu0 %v388
        %v390 = vpop.xlane.xlu0 %389
        %v392 = vsel %vm217, %v390, 0
        %394 = vmatprep.subr.mxu0 0.0
        %395 = vmatpush1.xpose.msra.mxu0 %v392
        %396 = vmatprep.subr.mxu0 0.0
        %397 = vmatpush1.xpose.msra.mxu0 0.0
        %398 = vmatprep.subr.mxu0 0.0
        %399 = vmatpush1.xpose.msra.mxu0 0.0
        %400 = vmatprep.subr.mxu0 0.0
        %401 = vmatpush1.xpose.msra.mxu0 0.0
        %402 = vmatprep.subr.mxu0 0.0
        %403 = vmatpush1.xpose.msra.mxu0 0.0
        %404 = vmatprep.subr.mxu0 0.0
        %405 = vmatpush1.xpose.msra.mxu0 0.0
        %406 = vmatprep.subr.mxu0 0.0
        %407 = vmatpush1.xpose.msra.mxu0 0.0
        %408 = vmatprep.subr.mxu0 0.0
        %409 = vmatpush1.xpose.msra.mxu0 0.0
        %410 = vmatprep.subr.mxu0 0.0
        %411 = vmatpush1.xpose.msra.mxu0 0.0
        %412 = vmatprep.subr.mxu0 0.0
        %413 = vmatpush1.xpose.msra.mxu0 0.0
        %414 = vmatprep.subr.mxu0 0.0
        %415 = vmatpush1.xpose.msra.mxu0 0.0
        %416 = vmatprep.subr.mxu0 0.0
        %417 = vmatpush1.xpose.msra.mxu0 0.0
        %418 = vmatprep.subr.mxu0 0.0
        %419 = vmatpush1.xpose.msra.mxu0 0.0
        %420 = vmatprep.subr.mxu0 0.0
        %421 = vmatpush1.xpose.msra.mxu0 0.0
        %422 = vmatprep.subr.mxu0 0.0
        %423 = vmatpush1.xpose.msra.mxu0 0.0
        %424 = vmatprep.subr.mxu0 0.0
        %425 = vmatpush1.xpose.msra.mxu0 0.0
        %426 = vmatprep.subr.mxu0 0.0
        %427 = vmatpush1.xpose.msra.mxu0 0.0
        %428 = vmatprep.subr.mxu0 0.0
        %429 = vmatpush1.xpose.msra.mxu0 0.0
        %430 = vmatprep.subr.mxu0 0.0
        %431 = vmatpush1.xpose.msra.mxu0 0.0
        %432 = vmatprep.subr.mxu0 0.0
        %433 = vmatpush1.xpose.msra.mxu0 0.0
        %434 = vmatprep.subr.mxu0 0.0
        %435 = vmatpush1.xpose.msra.mxu0 0.0
        %436 = vmatprep.subr.mxu0 0.0
        %437 = vmatpush1.xpose.msra.mxu0 0.0
        %438 = vmatprep.subr.mxu0 0.0
        %439 = vmatpush1.xpose.msra.mxu0 0.0
        %440 = vmatprep.subr.mxu0 0.0
        %441 = vmatpush1.xpose.msra.mxu0 0.0
        %442 = vmatprep.subr.mxu0 0.0
        %443 = vmatpush1.xpose.msra.mxu0 0.0
        %444 = vmatprep.subr.mxu0 0.0
        %445 = vmatpush1.xpose.msra.mxu0 0.0
        %446 = vmatprep.subr.mxu0 0.0
        %447 = vmatpush1.xpose.msra.mxu0 0.0
        %448 = vmatprep.subr.mxu0 0.0
        %449 = vmatpush1.xpose.msra.mxu0 0.0
        %450 = vmatprep.subr.mxu0 0.0
        %451 = vmatpush1.xpose.msra.mxu0 0.0
        %452 = vmatprep.subr.mxu0 0.0
        %453 = vmatpush1.xpose.msra.mxu0 0.0
        %454 = vmatprep.subr.mxu0 0.0
        %455 = vmatpush1.xpose.msra.mxu0 0.0
        %456 = vmatprep.subr.mxu0 0.0
        %457 = vmatpush1.xpose.msra.mxu0 0.0
        %458 = vmatprep.mubr.f32.mxu0 0.0
        %459 = vmatmul.mubr.f32.gmra.mrb[0].mxu0 %v392
        %v460 = vpop.f32.mrb[0].mxu0
        %v461 = vadd.f32 0.0, %v460
        %v462 = vpop.f32.mrb[0].mxu0
        %463 = vdwg.mxu0
        %v464 = vmul.f32 %v461, 0.2
        %v465 = vsub.f32 %v383, %v464
        %v466 = vsel %vm136, %v465, 0.0
        %v467 = vsel %vm294, %v466, 0.0
        %468 = vadd.xlane.f32.xlu0 %v467
        %v469 = vpop.xlane.xlu0 %468
        %v470 = vrot.slane %v469, 4
        %v471 = vadd.f32 %v469, %v470
        %v472 = vrot.slane %v471, 2
        %v473 = vadd.f32 %v471, %v472
        %v474 = vrot.slane %v473, 1
        %v475 = vadd.f32 %v473, %v474
        %v476 = vrcp.pop %v475
        %v477 = vmul.f32 1.0, %v476
        %v478 = vmul.f32 %v465, %v477
        %v479 = vadd.f32 %v478, %v137
        %s480 = scalar_lea.vmem %s131, 4 [#allocation5]
        %481 = vst.msk [vmem:[%s480] sm:$0xf] %vm294, %v479
        %v482 = vld [vmem:[%s113] sm:$0xf]
        %484 = vrot.lane.b32.xlu0 %v482, 117
        %v485 = vpop.permute.xlu0 %484
        %v486 = vsel %vm313, %v485, 0
        %488 = vmatprep.subr.mxu0 0.0
        %489 = vmatpush1.xpose.msra.mxu0 %v486
        %490 = vmatprep.subr.mxu0 0.0
        %491 = vmatpush1.xpose.msra.mxu0 0.0
        %492 = vmatprep.subr.mxu0 0.0
        %493 = vmatpush1.xpose.msra.mxu0 0.0
        %494 = vmatprep.subr.mxu0 0.0
        %495 = vmatpush1.xpose.msra.mxu0 0.0
        %496 = vmatprep.subr.mxu0 0.0
        %497 = vmatpush1.xpose.msra.mxu0 0.0
        %498 = vmatprep.subr.mxu0 0.0
        %499 = vmatpush1.xpose.msra.mxu0 0.0
        %500 = vmatprep.subr.mxu0 0.0
        %501 = vmatpush1.xpose.msra.mxu0 0.0
        %502 = vmatprep.subr.mxu0 0.0
        %503 = vmatpush1.xpose.msra.mxu0 0.0
        %504 = vmatprep.subr.mxu0 0.0
        %505 = vmatpush1.xpose.msra.mxu0 0.0
        %506 = vmatprep.subr.mxu0 0.0
        %507 = vmatpush1.xpose.msra.mxu0 0.0
        %508 = vmatprep.subr.mxu0 0.0
        %509 = vmatpush1.xpose.msra.mxu0 0.0
        %510 = vmatprep.subr.mxu0 0.0
        %511 = vmatpush1.xpose.msra.mxu0 0.0
        %512 = vmatprep.subr.mxu0 0.0
        %513 = vmatpush1.xpose.msra.mxu0 0.0
        %514 = vmatprep.subr.mxu0 0.0
        %515 = vmatpush1.xpose.msra.mxu0 0.0
        %516 = vmatprep.subr.mxu0 0.0
        %517 = vmatpush1.xpose.msra.mxu0 0.0
        %518 = vmatprep.subr.mxu0 0.0
        %519 = vmatpush1.xpose.msra.mxu0 0.0
        %520 = vmatprep.subr.mxu0 0.0
        %521 = vmatpush1.xpose.msra.mxu0 0.0
        %522 = vmatprep.subr.mxu0 0.0
        %523 = vmatpush1.xpose.msra.mxu0 0.0
        %524 = vmatprep.subr.mxu0 0.0
        %525 = vmatpush1.xpose.msra.mxu0 0.0
        %526 = vmatprep.subr.mxu0 0.0
        %527 = vmatpush1.xpose.msra.mxu0 0.0
        %528 = vmatprep.subr.mxu0 0.0
        %529 = vmatpush1.xpose.msra.mxu0 0.0
        %530 = vmatprep.subr.mxu0 0.0
        %531 = vmatpush1.xpose.msra.mxu0 0.0
        %532 = vmatprep.subr.mxu0 0.0
        %533 = vmatpush1.xpose.msra.mxu0 0.0
        %534 = vmatprep.subr.mxu0 0.0
        %535 = vmatpush1.xpose.msra.mxu0 0.0
        %536 = vmatprep.subr.mxu0 0.0
        %537 = vmatpush1.xpose.msra.mxu0 0.0
        %538 = vmatprep.subr.mxu0 0.0
        %539 = vmatpush1.xpose.msra.mxu0 0.0
        %540 = vmatprep.subr.mxu0 0.0
        %541 = vmatpush1.xpose.msra.mxu0 0.0
        %542 = vmatprep.subr.mxu0 0.0
        %543 = vmatpush1.xpose.msra.mxu0 0.0
        %544 = vmatprep.subr.mxu0 0.0
        %545 = vmatpush1.xpose.msra.mxu0 0.0
        %546 = vmatprep.subr.mxu0 0.0
        %547 = vmatpush1.xpose.msra.mxu0 0.0
        %548 = vmatprep.subr.mxu0 0.0
        %549 = vmatpush1.xpose.msra.mxu0 0.0
        %550 = vmatprep.subr.mxu0 0.0
        %551 = vmatpush1.xpose.msra.mxu0 0.0
        %552 = vmatprep.mubr.f32.mxu0 0.0
        %553 = vmatmul.mubr.f32.gmra.mrb[0].mxu0 %v486
        %v554 = vpop.f32.mrb[0].mxu0
        %v555 = vadd.f32 0.0, %v554
        %v556 = vpop.f32.mrb[0].mxu0
        %557 = vdwg.mxu0
        %v559 = vsel %vm387, %v485, 0.0
        %560 = vadd.xlane.f32.xlu0 %v559
        %v561 = vpop.xlane.xlu0 %560
        %v563 = vsel %vm217, %v561, 0
        %565 = vmatprep.subr.mxu0 0.0
        %566 = vmatpush1.xpose.msra.mxu0 %v563
        %567 = vmatprep.subr.mxu0 0.0
        %568 = vmatpush1.xpose.msra.mxu0 0.0
        %569 = vmatprep.subr.mxu0 0.0
        %570 = vmatpush1.xpose.msra.mxu0 0.0
        %571 = vmatprep.subr.mxu0 0.0
        %572 = vmatpush1.xpose.msra.mxu0 0.0
        %573 = vmatprep.subr.mxu0 0.0
        %574 = vmatpush1.xpose.msra.mxu0 0.0
        %575 = vmatprep.subr.mxu0 0.0
        %576 = vmatpush1.xpose.msra.mxu0 0.0
        %577 = vmatprep.subr.mxu0 0.0
        %578 = vmatpush1.xpose.msra.mxu0 0.0
        %579 = vmatprep.subr.mxu0 0.0
        %580 = vmatpush1.xpose.msra.mxu0 0.0
        %581 = vmatprep.subr.mxu0 0.0
        %582 = vmatpush1.xpose.msra.mxu0 0.0
        %583 = vmatprep.subr.mxu0 0.0
        %584 = vmatpush1.xpose.msra.mxu0 0.0
        %585 = vmatprep.subr.mxu0 0.0
        %586 = vmatpush1.xpose.msra.mxu0 0.0
        %587 = vmatprep.subr.mxu0 0.0
        %588 = vmatpush1.xpose.msra.mxu0 0.0
        %589 = vmatprep.subr.mxu0 0.0
        %590 = vmatpush1.xpose.msra.mxu0 0.0
        %591 = vmatprep.subr.mxu0 0.0
        %592 = vmatpush1.xpose.msra.mxu0 0.0
        %593 = vmatprep.subr.mxu0 0.0
        %594 = vmatpush1.xpose.msra.mxu0 0.0
        %595 = vmatprep.subr.mxu0 0.0
        %596 = vmatpush1.xpose.msra.mxu0 0.0
        %597 = vmatprep.subr.mxu0 0.0
        %598 = vmatpush1.xpose.msra.mxu0 0.0
        %599 = vmatprep.subr.mxu0 0.0
        %600 = vmatpush1.xpose.msra.mxu0 0.0
        %601 = vmatprep.subr.mxu0 0.0
        %602 = vmatpush1.xpose.msra.mxu0 0.0
        %603 = vmatprep.subr.mxu0 0.0
        %604 = vmatpush1.xpose.msra.mxu0 0.0
        %605 = vmatprep.subr.mxu0 0.0
        %606 = vmatpush1.xpose.msra.mxu0 0.0
        %607 = vmatprep.subr.mxu0 0.0
        %608 = vmatpush1.xpose.msra.mxu0 0.0
        %609 = vmatprep.subr.mxu0 0.0
        %610 = vmatpush1.xpose.msra.mxu0 0.0
        %611 = vmatprep.subr.mxu0 0.0
        %612 = vmatpush1.xpose.msra.mxu0 0.0
        %613 = vmatprep.subr.mxu0 0.0
        %614 = vmatpush1.xpose.msra.mxu0 0.0
        %615 = vmatprep.subr.mxu0 0.0
        %616 = vmatpush1.xpose.msra.mxu0 0.0
        %617 = vmatprep.subr.mxu0 0.0
        %618 = vmatpush1.xpose.msra.mxu0 0.0
        %619 = vmatprep.subr.mxu0 0.0
        %620 = vmatpush1.xpose.msra.mxu0 0.0
        %621 = vmatprep.subr.mxu0 0.0
        %622 = vmatpush1.xpose.msra.mxu0 0.0
        %623 = vmatprep.subr.mxu0 0.0
        %624 = vmatpush1.xpose.msra.mxu0 0.0
        %625 = vmatprep.subr.mxu0 0.0
        %626 = vmatpush1.xpose.msra.mxu0 0.0
        %627 = vmatprep.subr.mxu0 0.0
        %628 = vmatpush1.xpose.msra.mxu0 0.0
        %629 = vmatprep.mubr.f32.mxu0 0.0
        %630 = vmatmul.mubr.f32.gmra.mrb[0].mxu0 %v563
        %v631 = vpop.f32.mrb[0].mxu0
        %v632 = vadd.f32 0.0, %v631
        %v633 = vpop.f32.mrb[0].mxu0
        %634 = vdwg.mxu0
        %v635 = vmul.f32 %v632, 0.2
        %v636 = vsub.f32 %v555, %v635
        %v637 = vsel %vm136, %v636, 0.0
        %v638 = vsel %vm294, %v637, 0.0
        %639 = vadd.xlane.f32.xlu0 %v638
        %v640 = vpop.xlane.xlu0 %639
        %v641 = vrot.slane %v640, 4
        %v642 = vadd.f32 %v640, %v641
        %v643 = vrot.slane %v642, 2
        %v644 = vadd.f32 %v642, %v643
        %v645 = vrot.slane %v644, 1
        %v646 = vadd.f32 %v644, %v645
        %v647 = vrcp.pop %v646
        %v648 = vmul.f32 1.0, %v647
        %v649 = vmul.f32 %v636, %v648
        %v650 = vadd.f32 %v649, %v137
        %s651 = scalar_lea.vmem %s131, 8 [#allocation5]
        %652 = vst.msk [vmem:[%s651] sm:$0xf] %vm294, %v650
        %s653 = sand.u32 %s52, 1
        %s654 = scalar_lea.sflag [#allocation4], %s653
        %s655 = sand.u32 %s52, 1
        %s656 = smul.addr %s655, 12
        %s657 = scalar_lea.vmem [#allocation5], %s656
        // Predicated region
        $region29: #{tpu_custom_call.1} parent=23 // pred_check
          %p658 = pneg %p62
        $region30: #{tpu_custom_call.1} parent=23 // pred_check_branch
          %660 = sbr.rel (%p658) target = $region32
        $region31: #{tpu_custom_call.1} parent=23 // pred_region
          %s662 = ssub.s32 192, 192
          %663 = vsyncadd %s654, %s662
          %s664 = smul.addr %s18, 3
          %s665 = smul.addr %s664, 64
          %s666 = scalar_lea.hbm %s1, %s665
          %s667 = sshll.u32 %s657, 4
          %s668 = int_to_ptr.vmem [resolvable:$true] %s667
          %673 = dma.vmem_to_hbm [thread:$0]  %s668, 192, %s666, %s654, 64, 64, 4
        $region32: #{tpu_custom_call.1} parent=23 // pred_fallthru
          _
      $region24: #{tpu_custom_call.1} parent=5 // pred_fallthru
        _
      %p674 = scmp.le.s32.totalorder 2, %s13
      // Predicated region
      $region33: #{tpu_custom_call.1} parent=5 // pred_check
        %p675 = pneg %p674
      $region34: #{tpu_custom_call.1} parent=5 // pred_check_branch
        %677 = sbr.rel (%p675) target = $region36
      $region35: #{tpu_custom_call.1} parent=5 // pred_region
        %s678 = ssub.s32 %s13, 2
        // Predicated region
        $region37: #{tpu_custom_call.1} parent=35 // pred_check
          %p679 = pneg %p68
        $region38: #{tpu_custom_call.1} parent=35 // pred_check_branch
          %681 = sbr.rel (%p679) target = $region40
        $region39: #{tpu_custom_call.1} parent=35 // pred_region
          %s682 = sand.u32 %s53, 1
          %s683 = scalar_lea.sflag [#allocation4], %s682
          %s684 = sand.u32 %s53, 1
          %s685 = smul.addr %s684, 12
          %s686 = scalar_lea.vmem [#allocation5], %s685
          %687 = dma.done %s683, 192
        $region40: #{tpu_custom_call.1} parent=35 // pred_fallthru
          _
      $region36: #{tpu_custom_call.1} parent=5 // pred_fallthru
        _
    $region6: #{tpu_custom_call.1} parent=1 // loop_footer
      %s17 = sadd.s32 1, %s13
    $region7: #{tpu_custom_call.1} parent=1 // loop_footer_branch
      %12 = sbr.rel target = $region3
    $region8: #{tpu_custom_call.1} parent=1 // loop_exit
      _
    %688 = vsyncpa [#allocation3], 1
    %s689 = scalar_lea.sflag [#allocation3], 1
    %690 = vsyncpa %s689, 1
    %691 = vsyncpa [#allocation4], 1
    %s692 = scalar_lea.sflag [#allocation4], 1
    %693 = vsyncpa %s692, 1

</llo_original>
